<compile_context>
chip_gen: v6e
topology: v6e:2x2x1
jax: 0.10.0
libtpu: 0.0.40
codegen_flags: <defaults>
</compile_context>

<pallas_src>
import functools

import jax
import jax.numpy as jnp
from jax import lax
from jax.experimental import pallas as pl
from jax.experimental.pallas import tpu as pltpu


LANE = 128
HALO = 2                 # two cascaded 3-tap convs -> 2-row halo per side
DEFAULT_TILE_L = 256     # deep M tile keeps the 256-wide MXU busy at N=128


# ---------------------------------------------------------------------------
# Kernel
# ---------------------------------------------------------------------------
def basic_block_kernel(x_ref, halo_ref, w1_ref, w2_ref, p_ref, o_ref, *,
                       tile_l, l_true):
    t = pl.program_id(1)

    x = x_ref[0]                       # (tile_l, C) f32, lane-padded
    halo = halo_ref[0, 0]              # (8, C) f32: rows 0-1 left, 2-3 right
    left, right = halo[0:2], halo[2:4]

    p = p_ref[...]                     # (8, C) packed BN affines
    s1, b1 = p[0:1], p[1:2]
    s2, b2 = p[2:3], p[3:4]
    s3, b3 = p[4:5], p[5:6]

    # Extended activation with 2-row halo per side: rows map to global
    # sequence positions [t*tile_l - 2, t*tile_l + tile_l + 2).
    xe = jnp.concatenate([left, x, right], axis=0)      # (tile_l + 4, C)
    n_ext = tile_l + 2 * HALO

    # Rows outside [0, l_true) must be zero AFTER the BN affine: that is both
    # the conv's zero padding and the L-rounding pad.  Two (N,1)-broadcast
    # selects per body (down from 4 full (L,C) selects previously).
    g0 = t * tile_l - HALO
    row = lax.broadcasted_iota(jnp.int32, (n_ext, 1), 0) + g0
    valid1 = jnp.logical_and(row >= 0, row < l_true)

    h1 = jnp.where(valid1, xe * s1 + b1, 0.0)           # bn1, f32

    def conv3(h, w_ref):
        # 3-tap conv as ONE K-deep MXU matmul; each tap is cast to bf16
        # before the lane concat (no f32 (N,3C) intermediate).
        n = h.shape[0]
        stk = jnp.concatenate([h[0:n - 2].astype(jnp.bfloat16),
                               h[1:n - 1].astype(jnp.bfloat16),
                               h[2:n].astype(jnp.bfloat16)], axis=-1)
        return jnp.dot(stk, w_ref[...], preferred_element_type=jnp.float32)

    y1 = conv3(h1, w1_ref)                              # (tile_l + 2, C)
    valid2 = valid1[1:tile_l + 3]
    h2 = jnp.where(valid2, jnp.maximum(y1 * s2 + b2, 0.0), 0.0)   # bn2 + relu

    y2 = conv3(h2, w2_ref)                              # (tile_l, C)
    y3 = y2 * s3 + b3                                   # bn3

    # Residual: x is already zero on lanes >= Cin, which is exactly the
    # PyramidNet zero-channel-padded identity -> plain VPU add, lane-dense
    # full-tile store.
    o_ref[0] = y3 + x


# ---------------------------------------------------------------------------
# pallas_call wrapper (all inputs already channel-padded to the same C)
# ---------------------------------------------------------------------------
def basic_block_pallas(x_main, halo, w1_stk, w2_stk, params, *, tile_l, l_true):
    """x_main: (B, L_round, C) f32; halo: (B, nt, 8, C) f32;
    w*_stk: (3C, C) bf16; params: (8, C) f32 (s1,b1,s2,b2,s3,b3,0,0)."""
    B, L_round, C = x_main.shape
    nt = L_round // tile_l
    K = w1_stk.shape[0]

    const_map = lambda b, t: (0, 0)

    # Explicit VMEM budget: x/out tiles double-buffered + single-buffered
    # constants + in-kernel intermediates, with 2x headroom, capped at 64 MiB
    # (v7x physical VMEM).
    est = (4 * tile_l * C * 4          # x + out tiles, double-buffered
           + 2 * 8 * C * 4             # halo tile, double-buffered
           + 2 * K * C * 2             # two stacked bf16 weights (single buf)
           + 8 * C * 4                 # packed BN params
           + 28 * tile_l * C)          # h1/h2/y*/bf16 tap stacks
    vmem_limit = int(min(64 * 2**20, max(32 * 2**20, 2 * est)))

    kernel = functools.partial(basic_block_kernel, tile_l=tile_l, l_true=l_true)

    return pl.pallas_call(
        kernel,
        out_shape=jax.ShapeDtypeStruct((B, L_round, C), jnp.float32),
        grid_spec=pltpu.PrefetchScalarGridSpec(
            num_scalar_prefetch=0,
            grid=(B, nt),
            in_specs=[
                pl.BlockSpec((1, tile_l, C), lambda b, t: (b, t, 0)),    # x tile
                pl.BlockSpec((1, 1, 8, C), lambda b, t: (b, t, 0, 0)),   # halo
                pl.BlockSpec((K, C), const_map,                          # conv1 W
                             pipeline_mode=pl.Buffered(1)),
                pl.BlockSpec((K, C), const_map,                          # conv2 W
                             pipeline_mode=pl.Buffered(1)),
                pl.BlockSpec((8, C), const_map,                          # BN params
                             pipeline_mode=pl.Buffered(1)),
            ],
            out_specs=pl.BlockSpec((1, tile_l, C), lambda b, t: (b, t, 0)),
        ),
        compiler_params=pltpu.CompilerParams(
            dimension_semantics=("parallel", "parallel"),
            vmem_limit_bytes=vmem_limit),
    )(x_main, halo, w1_stk, w2_stk, params)


# ---------------------------------------------------------------------------
# Layout prep from PyTorch-style parameters
# ---------------------------------------------------------------------------
def _round_up(n, m):
    return ((n + m - 1) // m) * m


def _fold_bn(gamma, beta, mean, var, eps=1e-5):
    scale = gamma / jnp.sqrt(var + eps)
    return scale, beta - mean * scale


def _pad_channels(a, target):
    pad = target - a.shape[-1]
    if pad == 0:
        return a
    return jnp.pad(a, [(0, 0)] * (a.ndim - 1) + [(0, pad)])


def _stack_conv_weight(w_oik, c_pad):
    """PyTorch (Cout, Cin, 3) -> stacked (3*c_pad, c_pad) bf16.

    Row block k multiplies the tap h[i - 1 + k] (k=0 -> previous row)."""
    w_kio = jnp.transpose(w_oik, (2, 1, 0)).astype(jnp.float32)  # (3, Cin, Cout)
    k, cin, cout = w_kio.shape
    w_p = jnp.zeros((k, c_pad, c_pad), jnp.float32)
    w_p = w_p.at[:, :cin, :cout].set(w_kio)
    return w_p.reshape(k * c_pad, c_pad).astype(jnp.bfloat16)


def basic_block_forward(x_ncl, w1_oik, w2_oik, bn1, bn2, bn3, eps=1e-5,
                        tile_l=DEFAULT_TILE_L):
    """BasicBlock forward (inference).  x_ncl: (B, Cin, L) f32.
    bn* = (gamma, beta, running_mean, running_var)."""
    B, Cin, L = x_ncl.shape
    Cout = w1_oik.shape[0]
    assert Cin <= Cout, "zero-channel-padded residual requires Cin <= Cout"
    # Keep C at the 128-lane pad (don't widen N to 256 on v6e/v7x; deep M
    # tile amortizes MXU push overhead instead).
    C = _round_up(max(Cin, Cout), LANE)

    tile = min(_round_up(tile_l, 8), _round_up(L, 8))
    l_round = _round_up(L, tile)
    nt = l_round // tile

    s1, sh1 = _fold_bn(*bn1, eps)
    s2, sh2 = _fold_bn(*bn2, eps)
    s3, sh3 = _fold_bn(*bn3, eps)

    x_blc = _pad_channels(jnp.transpose(x_ncl, (0, 2, 1)).astype(jnp.float32), C)
    x_main = jnp.pad(x_blc, ((0, 0), (0, l_round - L), (0, 0)))     # (B, Lr, C)
    x_ext = jnp.pad(x_main, ((0, 0), (HALO, HALO), (0, 0)))         # (B, Lr+4, C)
    # Per-tile halos (2 rows each side), padded to 8 sublanes.
    left = x_ext[:, :l_round, :].reshape(B, nt, tile, C)[:, :, :HALO, :]
    right = x_ext[:, 2 * HALO:2 * HALO + l_round, :].reshape(
        B, nt, tile, C)[:, :, tile - HALO:, :]
    halo = jnp.concatenate(
        [left, right, jnp.zeros((B, nt, 8 - 2 * HALO, C), jnp.float32)], axis=2)

    w1_stk = _stack_conv_weight(w1_oik, C)                          # (3C, C) bf16
    w2_stk = _stack_conv_weight(w2_oik, C)

    params = jnp.zeros((8, C), jnp.float32)
    for i, p in enumerate((s1, sh1, s2, sh2, s3, sh3)):
        params = params.at[i, :p.shape[0]].set(p.astype(jnp.float32))

    out_p = basic_block_pallas(x_main, halo, w1_stk, w2_stk, params,
                               tile_l=tile, l_true=L)               # (B, Lr, C)
    return jnp.transpose(out_p[:, :L, :Cout], (0, 2, 1))            # (B, Cout, L)


# ---------------------------------------------------------------------------
# Pure-JAX f32 reference (PyTorch NCL semantics)
# ---------------------------------------------------------------------------
def _ref_forward(x_ncl, w1_oik, w2_oik, s1, b1, s2, b2, s3, b3):
    dn = ('NCH', 'OIH', 'NCH')
    h = x_ncl * s1[None, :, None] + b1[None, :, None]
    y1 = lax.conv_general_dilated(h, w1_oik, (1,), [(1, 1)],
                                  dimension_numbers=dn)
    h2 = jnp.maximum(y1 * s2[None, :, None] + b2[None, :, None], 0.0)
    y2 = lax.conv_general_dilated(h2, w2_oik, (1,), [(1, 1)],
                                  dimension_numbers=dn)
    y3 = y2 * s3[None, :, None] + b3[None, :, None]
    B, Cin, L = x_ncl.shape
    Cout = y3.shape[1]
    if Cin != Cout:
        identity = jnp.concatenate(
            [x_ncl, jnp.zeros((B, Cout - Cin, L), x_ncl.dtype)], axis=1)
    else:
        identity = x_ncl
    return y3 + identity


# ---------------------------------------------------------------------------
# Self-test
# ---------------------------------------------------------------------------
def _rand_bn(key, c):
    k1, k2, k3, k4 = jax.random.split(key, 4)
    g = 1.0 + 0.1 * jax.random.normal(k1, (c,), jnp.float32)
    b = 0.1 * jax.random.normal(k2, (c,), jnp.float32)
    m = 0.1 * jax.random.normal(k3, (c,), jnp.float32)
    v = 1.0 + 0.1 * jnp.abs(jax.random.normal(k4, (c,), jnp.float32))
    return g, b, m, v


def _run_case(key, B, Cin, Cout, L, tile_l):
    ks = jax.random.split(key, 6)
    w1 = 0.1 * jax.random.normal(ks[0], (Cout, Cin, 3), jnp.float32)
    w2 = 0.1 * jax.random.normal(ks[1], (Cout, Cout, 3), jnp.float32)
    bn1, bn2, bn3 = _rand_bn(ks[2], Cin), _rand_bn(ks[3], Cout), _rand_bn(ks[4], Cout)
    x = jax.random.normal(ks[5], (B, Cin, L), jnp.float32)

    out = basic_block_forward(x, w1, w2, bn1, bn2, bn3, tile_l=tile_l)
    out = jax.block_until_ready(out)

    ref = _ref_forward(x, w1, w2,
                       *_fold_bn(*bn1), *_fold_bn(*bn2), *_fold_bn(*bn3))
    assert out.shape == (B, Cout, L)
    err = float(jnp.max(jnp.abs(out - ref)))
    # bf16 matmul operands -> looser tolerance vs. the pure-f32 reference.
    assert jnp.allclose(out, ref, rtol=3e-2, atol=3e-2), err
    return err


if __name__ == "__main__":
    key = jax.random.PRNGKey(0)
    k1, k2 = jax.random.split(key)
    # Single L-tile, channel-expanding residual (inplanes=4 -> planes=8).
    _run_case(k1, B=2, Cin=4, Cout=8, L=16, tile_l=256)
    # Multi L-tile path: 3 tiles with real halos + L rounded 40 -> 48,
    # equal-channel residual.
    _run_case(k2, B=2, Cin=8, Cout=8, L=40, tile_l=16)
    print("KERNEL_OK")
</pallas_src>

<mosaic_0001>
module attributes {stable_mosaic.version = 11 : i64} {
  func.func @basic_block_kernel(%arg0: i32, %arg1: i32, %arg2: memref<1x16x128xf32, #tpu.memory_space<vmem>>, %arg3: memref<1x1x8x128xf32, #tpu.memory_space<vmem>>, %arg4: memref<384x128xbf16, #tpu.memory_space<vmem>>, %arg5: memref<384x128xbf16, #tpu.memory_space<vmem>>, %arg6: memref<8x128xf32, #tpu.memory_space<vmem>>, %arg7: memref<1x16x128xf32, #tpu.memory_space<vmem>>) attributes {dimension_semantics = [#tpu.dimension_semantics<parallel>, #tpu.dimension_semantics<parallel>], iteration_bounds = array<i64: 2, 1>, scalar_prefetch = 0 : i64, scratch_operands = 0 : i64, tpu.core_type = #tpu.core_type<tc>, window_params = [{transform_indices = @transform_0, window_bounds = array<i64: 1, 16, 128>}, {transform_indices = @transform_1, window_bounds = array<i64: 1, 1, 8, 128>}, {pipeline_mode = #tpu.pipeline_mode<synchronous>, transform_indices = @transform_2, window_bounds = array<i64: 384, 128>}, {pipeline_mode = #tpu.pipeline_mode<synchronous>, transform_indices = @transform_3, window_bounds = array<i64: 384, 128>}, {pipeline_mode = #tpu.pipeline_mode<synchronous>, transform_indices = @transform_4, window_bounds = array<i64: 8, 128>}, {transform_indices = @transform_5, window_bounds = array<i64: 1, 16, 128>}]} {
    %c0 = arith.constant 0 : index
    %c0_0 = arith.constant 0 : index
    %c0_1 = arith.constant 0 : index
    %0 = vector.load %arg2[%c0, %c0_0, %c0_1] : memref<1x16x128xf32, #tpu.memory_space<vmem>>, vector<1x16x128xf32>
    %1 = vector.shape_cast %0 : vector<1x16x128xf32> to vector<16x128xf32>
    %c0_2 = arith.constant 0 : index
    %c0_3 = arith.constant 0 : index
    %c0_4 = arith.constant 0 : index
    %c0_5 = arith.constant 0 : index
    %2 = vector.load %arg3[%c0_2, %c0_3, %c0_4, %c0_5] : memref<1x1x8x128xf32, #tpu.memory_space<vmem>>, vector<1x1x8x128xf32>
    %3 = vector.shape_cast %2 : vector<1x1x8x128xf32> to vector<8x128xf32>
    %4 = vector.extract_strided_slice %3 {offsets = [0, 0], sizes = [2, 128], strides = [1, 1]} : vector<8x128xf32> to vector<2x128xf32>
    %5 = vector.extract_strided_slice %3 {offsets = [2, 0], sizes = [2, 128], strides = [1, 1]} : vector<8x128xf32> to vector<2x128xf32>
    %c0_6 = arith.constant 0 : index
    %c0_7 = arith.constant 0 : index
    %6 = vector.load %arg6[%c0_6, %c0_7] : memref<8x128xf32, #tpu.memory_space<vmem>>, vector<8x128xf32>
    %7 = vector.extract_strided_slice %6 {offsets = [0, 0], sizes = [1, 128], strides = [1, 1]} : vector<8x128xf32> to vector<1x128xf32>
    %8 = vector.extract_strided_slice %6 {offsets = [1, 0], sizes = [1, 128], strides = [1, 1]} : vector<8x128xf32> to vector<1x128xf32>
    %9 = vector.extract_strided_slice %6 {offsets = [2, 0], sizes = [1, 128], strides = [1, 1]} : vector<8x128xf32> to vector<1x128xf32>
    %10 = vector.extract_strided_slice %6 {offsets = [3, 0], sizes = [1, 128], strides = [1, 1]} : vector<8x128xf32> to vector<1x128xf32>
    %11 = vector.extract_strided_slice %6 {offsets = [4, 0], sizes = [1, 128], strides = [1, 1]} : vector<8x128xf32> to vector<1x128xf32>
    %12 = vector.extract_strided_slice %6 {offsets = [5, 0], sizes = [1, 128], strides = [1, 1]} : vector<8x128xf32> to vector<1x128xf32>
    %13 = tpu.concatenate %4, %1, %5 in 0 : vector<2x128xf32>, vector<16x128xf32>, vector<2x128xf32> -> vector<20x128xf32>
    %c16_i32 = arith.constant 16 : i32
    %14 = arith.muli %arg1, %c16_i32 : i32
    %c2_i32 = arith.constant 2 : i32
    %15 = arith.subi %14, %c2_i32 : i32
    %16 = tpu.iota {dimensions = array<i32: 0>} : vector<20x1xi32>
    %17 = vector.broadcast %15 : i32 to vector<20x1xi32>
    %18 = arith.addi %16, %17 : vector<20x1xi32>
    %c0_i32 = arith.constant 0 : i32
    %19 = vector.broadcast %c0_i32 : i32 to vector<20x1xi32>
    %20 = arith.cmpi sge, %18, %19 : vector<20x1xi32>
    %c16_i32_8 = arith.constant 16 : i32
    %21 = vector.broadcast %c16_i32_8 : i32 to vector<20x1xi32>
    %22 = arith.cmpi slt, %18, %21 : vector<20x1xi32>
    %23 = arith.andi %20, %22 : vector<20x1xi1>
    %24 = vector.broadcast %7 : vector<1x128xf32> to vector<20x128xf32>
    %25 = arith.mulf %13, %24 : vector<20x128xf32>
    %26 = vector.broadcast %8 : vector<1x128xf32> to vector<20x128xf32>
    %27 = arith.addf %25, %26 : vector<20x128xf32>
    %cst = arith.constant 0.000000e+00 : f32
    %28 = vector.shape_cast %23 : vector<20x1xi1> to vector<20x1xi1>
    %29 = vector.broadcast %28 : vector<20x1xi1> to vector<20x128xi1>
    %30 = vector.broadcast %cst : f32 to vector<20x128xf32>
    %31 = arith.select %29, %27, %30 : vector<20x128xi1>, vector<20x128xf32>
    %32 = vector.extract_strided_slice %31 {offsets = [0, 0], sizes = [18, 128], strides = [1, 1]} : vector<20x128xf32> to vector<18x128xf32>
    %33 = arith.truncf %32 : vector<18x128xf32> to vector<18x128xbf16>
    %34 = vector.extract_strided_slice %31 {offsets = [1, 0], sizes = [18, 128], strides = [1, 1]} : vector<20x128xf32> to vector<18x128xf32>
    %35 = arith.truncf %34 : vector<18x128xf32> to vector<18x128xbf16>
    %36 = vector.extract_strided_slice %31 {offsets = [2, 0], sizes = [18, 128], strides = [1, 1]} : vector<20x128xf32> to vector<18x128xf32>
    %37 = arith.truncf %36 : vector<18x128xf32> to vector<18x128xbf16>
    %38 = tpu.concatenate %33, %35, %37 in 1 : vector<18x128xbf16>, vector<18x128xbf16>, vector<18x128xbf16> -> vector<18x384xbf16>
    %c0_9 = arith.constant 0 : index
    %c0_10 = arith.constant 0 : index
    %39 = vector.load %arg4[%c0_9, %c0_10] : memref<384x128xbf16, #tpu.memory_space<vmem>>, vector<384x128xbf16>
    %cst_11 = arith.constant dense<0.000000e+00> : vector<18x128xf32>
    %40 = tpu.matmul %38, %39, %cst_11 {dimension_numbers = #tpu.dot_dimension_numbers<[1], [0], [0], [1], [0, 0, 1, 1], [], []>} : vector<18x384xbf16>, vector<384x128xbf16>, vector<18x128xf32> -> vector<18x128xf32>
    %41 = vector.extract_strided_slice %23 {offsets = [1, 0], sizes = [18, 1], strides = [1, 1]} : vector<20x1xi1> to vector<18x1xi1>
    %42 = vector.broadcast %9 : vector<1x128xf32> to vector<18x128xf32>
    %43 = arith.mulf %40, %42 : vector<18x128xf32>
    %44 = vector.broadcast %10 : vector<1x128xf32> to vector<18x128xf32>
    %45 = arith.addf %43, %44 : vector<18x128xf32>
    %cst_12 = arith.constant 0.000000e+00 : f32
    %46 = vector.broadcast %cst_12 : f32 to vector<18x128xf32>
    %47 = arith.maximumf %45, %46 : vector<18x128xf32>
    %cst_13 = arith.constant 0.000000e+00 : f32
    %48 = vector.shape_cast %41 : vector<18x1xi1> to vector<18x1xi1>
    %49 = vector.broadcast %48 : vector<18x1xi1> to vector<18x128xi1>
    %50 = vector.broadcast %cst_13 : f32 to vector<18x128xf32>
    %51 = arith.select %49, %47, %50 : vector<18x128xi1>, vector<18x128xf32>
    %52 = vector.extract_strided_slice %51 {offsets = [0, 0], sizes = [16, 128], strides = [1, 1]} : vector<18x128xf32> to vector<16x128xf32>
    %53 = arith.truncf %52 : vector<16x128xf32> to vector<16x128xbf16>
    %54 = vector.extract_strided_slice %51 {offsets = [1, 0], sizes = [16, 128], strides = [1, 1]} : vector<18x128xf32> to vector<16x128xf32>
    %55 = arith.truncf %54 : vector<16x128xf32> to vector<16x128xbf16>
    %56 = vector.extract_strided_slice %51 {offsets = [2, 0], sizes = [16, 128], strides = [1, 1]} : vector<18x128xf32> to vector<16x128xf32>
    %57 = arith.truncf %56 : vector<16x128xf32> to vector<16x128xbf16>
    %58 = tpu.concatenate %53, %55, %57 in 1 : vector<16x128xbf16>, vector<16x128xbf16>, vector<16x128xbf16> -> vector<16x384xbf16>
    %c0_14 = arith.constant 0 : index
    %c0_15 = arith.constant 0 : index
    %59 = vector.load %arg5[%c0_14, %c0_15] : memref<384x128xbf16, #tpu.memory_space<vmem>>, vector<384x128xbf16>
    %cst_16 = arith.constant dense<0.000000e+00> : vector<16x128xf32>
    %60 = tpu.matmul %58, %59, %cst_16 {dimension_numbers = #tpu.dot_dimension_numbers<[1], [0], [0], [1], [0, 0, 1, 1], [], []>} : vector<16x384xbf16>, vector<384x128xbf16>, vector<16x128xf32> -> vector<16x128xf32>
    %61 = vector.broadcast %11 : vector<1x128xf32> to vector<16x128xf32>
    %62 = arith.mulf %60, %61 : vector<16x128xf32>
    %63 = vector.broadcast %12 : vector<1x128xf32> to vector<16x128xf32>
    %64 = arith.addf %62, %63 : vector<16x128xf32>
    %65 = arith.addf %64, %1 : vector<16x128xf32>
    %c0_17 = arith.constant 0 : index
    %c0_18 = arith.constant 0 : index
    %c0_19 = arith.constant 0 : index
    %66 = vector.load %arg7[%c0_17, %c0_18, %c0_19] : memref<1x16x128xf32, #tpu.memory_space<vmem>>, vector<1x16x128xf32>
    %67 = vector.shape_cast %66 : vector<1x16x128xf32> to vector<16x128xf32>
    %68 = vector.shape_cast %65 : vector<16x128xf32> to vector<1x16x128xf32>
    tpu.vector_store %arg7[%c0_17, %c0_18, %c0_19], %68 {strides = array<i32>} : memref<1x16x128xf32, #tpu.memory_space<vmem>>, vector<1x16x128xf32>,
    return
  }
  func.func @transform_0(%arg0: i32, %arg1: i32) -> (i32, i32, i32) {
    %c0_i32 = arith.constant 0 : i32
    %c0_i32_0 = arith.constant 0 : i32
    return %arg0, %arg1, %c0_i32 : i32, i32, i32
  }
  func.func @transform_1(%arg0: i32, %arg1: i32) -> (i32, i32, i32, i32) {
    %c0_i32 = arith.constant 0 : i32
    %c0_i32_0 = arith.constant 0 : i32
    %c0_i32_1 = arith.constant 0 : i32
    return %arg0, %arg1, %c0_i32, %c0_i32_0 : i32, i32, i32, i32
  }
  func.func @transform_2(%arg0: i32, %arg1: i32) -> (i32, i32) {
    %c0_i32 = arith.constant 0 : i32
    %c0_i32_0 = arith.constant 0 : i32
    %c0_i32_1 = arith.constant 0 : i32
    return %c0_i32, %c0_i32_0 : i32, i32
  }
  func.func @transform_3(%arg0: i32, %arg1: i32) -> (i32, i32) {
    %c0_i32 = arith.constant 0 : i32
    %c0_i32_0 = arith.constant 0 : i32
    %c0_i32_1 = arith.constant 0 : i32
    return %c0_i32, %c0_i32_0 : i32, i32
  }
  func.func @transform_4(%arg0: i32, %arg1: i32) -> (i32, i32) {
    %c0_i32 = arith.constant 0 : i32
    %c0_i32_0 = arith.constant 0 : i32
    %c0_i32_1 = arith.constant 0 : i32
    return %c0_i32, %c0_i32_0 : i32, i32
  }
  func.func @transform_5(%arg0: i32, %arg1: i32) -> (i32, i32, i32) {
    %c0_i32 = arith.constant 0 : i32
    %c0_i32_0 = arith.constant 0 : i32
    return %arg0, %arg1, %c0_i32 : i32, i32, i32
  }
}

</mosaic_0001>

<llo_original>
// kernel: tpu_custom_call.1
$region0: #{tpu_custom_call.1}
  #allocation0 [shape = 'u32[]', space=smem, size = 0x4, offset = 0x4, fixed_abs, tag = 'smem constant byte address 0x4 - core index']
  #allocation1 [shape = 'u32[144,128]{1,0:T(1,128)}', space=vmem, size = 0x12000, scoped, tag = 'internal scratch']
  %s0 = inlined_call_operand.hbm [shape: f32[2,16,128], index: 0, kind: input, shape index: {}]
  %s1 = inlined_call_operand.hbm [shape: f32[2,1,8,128], index: 1, kind: input, shape index: {}]
  %s2 = inlined_call_operand.hbm [shape: bf16[384,128], index: 2, kind: input, shape index: {}]
  %s3 = inlined_call_operand.hbm [shape: bf16[384,128], index: 3, kind: input, shape index: {}]
  %s4 = inlined_call_operand.hbm [shape: f32[8,128], index: 4, kind: input, shape index: {}]
  %s5 = inlined_call_operand.hbm [shape: f32[2,16,128], index: 5, kind: output, shape index: {}]
  %s6 = sld [smem:[#allocation0]]
  $region73: #{tpu_custom_call.1} parent=0
    _
  %s8 = ssub.s32 1, %s6
  %s9 = scalar_select 0, %s8, %s6
  $region1: #{tpu_custom_call.1} parent=0
    #allocation2 [shape = 'u8[16384]{0}', space=vmem, size = 0x4000, scoped, tag = 'input window, operand 0']
    #allocation3 [shape = 's32[2]{0}', space=sflag, size = 0x8, scoped, tag = 'scoped memory for tpu_custom_call.1']
    #allocation4 [shape = 's32[2]{0}', space=sflag, size = 0x8, scoped, tag = 'scoped memory for tpu_custom_call.1']
    #allocation5 [shape = 'u8[8192]{0}', space=vmem, size = 0x2000, scoped, tag = 'input window, operand 1']
    #allocation6 [shape = 's32[2]{0}', space=sflag, size = 0x8, scoped, tag = 'scoped memory for tpu_custom_call.1']
    #allocation7 [shape = 'u8[98304]{0}', space=vmem, size = 0x18000, scoped, tag = 'input window, operand 2, single buffered']
    #allocation8 [shape = 'u8[98304]{0}', space=vmem, size = 0x18000, scoped, tag = 'input window, operand 3, single buffered']
    #allocation9 [shape = 's32[1]{0}', space=sflag, size = 0x4, scoped, tag = 'scoped memory for tpu_custom_call.1']
    #allocation10 [shape = 'u8[4096]{0}', space=vmem, size = 0x1000, scoped, tag = 'input window, operand 4, single buffered']
    #allocation11 [shape = 'u8[16384]{0}', space=vmem, size = 0x4000, scoped, tag = 'output window, operand 0']
    %10 = vsyncpa [#allocation3], 0
    %s11 = scalar_lea.sflag [#allocation3], 1
    %12 = vsyncpa %s11, 0
    %13 = vsyncpa [#allocation6], 0
    %s14 = scalar_lea.sflag [#allocation6], 1
    %15 = vsyncpa %s14, 0
    %16 = vsyncpa [#allocation9], 0
    %17 = vsyncpa [#allocation4], 0
    %s18 = scalar_lea.sflag [#allocation4], 1
    %19 = vsyncpa %s18, 0
    loop: start=0, step=1, limit=4
    $region2: #{tpu_custom_call.1} parent=1 // loop_pre_header
      _
    $region3: #{tpu_custom_call.1} parent=1 // loop_header
      %s21 = sphi 0, %s25
      %p22 = scmp.ge.s32.totalorder %s21, 4
      %s28 = sphi 0, %s40
      %s29 = sphi 0, %s36
      %s30 = sphi 0, %s28
      %s31 = sphi 0, %s29
      %s32 = sphi 0, %s30
      %s33 = sphi 0, %s31
      %s45 = sphi 0, %s47
      %s48 = sphi 0, %s45
      %s49 = sphi 0, %s48
      %s65 = sphi 0, %s49
      %s73 = sphi 0, %s75
      %s76 = sphi 0, %s73
      %s77 = sphi 0, %s76
      %s93 = sphi 0, %s77
      %s97 = sphi 0, %s97
      %s99 = sphi 0, %s97
      %s100 = sphi 0, %s99
      %s114 = sphi 0, %s100
      %s118 = sphi 0, %s118
      %s120 = sphi 0, %s118
      %s121 = sphi 0, %s120
      %s135 = sphi 0, %s121
      %s139 = sphi 0, %s139
      %s141 = sphi 0, %s139
      %s142 = sphi 0, %s141
      %s156 = sphi 0, %s142
      %s164 = sphi 0, %s166
      %s167 = sphi 0, %s164
      %s168 = sphi 0, %s167
      %s184 = sphi 0, %s168
    $region4: #{tpu_custom_call.1} parent=1 // loop_header_branch
      %24 = sbr.rel (%p22) target = $region8
    $region5: #{tpu_custom_call.1} parent=1 // loop_body
      %s26 = ssub.s32 %s21, 1
      %s27 = ssub.s32 %s21, 2
      %s34 = sadd.s32 1, %s29
      %p35 = scmp.ge.s32.totalorder %s34, 1
      %s36 = scalar_select %p35, 0, %s34
      %s37 = sadd.s32 1, %s28
      %s38 = scalar_select %p35, %s37, %s28
      %p39 = scmp.ge.s32.totalorder %s38, 2
      %s40 = scalar_select %p39, 0, %s38
      %s41 = ssub.s32 %s28, %s40
      %s42 = ssub.s32 %s29, %s36
      %s43 = sor.u32 %s41, %s42
      %p44 = scmp.eq.s32.totalorder %s43, 0
      %s46 = sadd.s32 %s45, 1
      %s47 = scalar_select %p44, %s45, %s46
      %p50 = pneg %p44
      %p51 = scmp.eq.s32.totalorder %s21, 1
      %p52 = por %p50, %p51
      %p53 = scmp.ne.s32.totalorder %s45, %s48
      %p54 = scmp.eq.s32.totalorder %s21, 0
      %p55 = por %p53, %p54
      %p56 = scmp.ne.s32.totalorder %s45, %s48
      %p57 = scmp.eq.s32.totalorder %s26, 1
      %p58 = por %p56, %p57
      %p59 = scmp.ne.s32.totalorder %s48, %s49
      %p60 = scmp.eq.s32.totalorder %s26, 0
      %p61 = por %p59, %p60
      %p62 = scmp.ne.s32.totalorder %s48, %s49
      %p63 = scmp.eq.s32.totalorder %s27, 1
      %p64 = por %p62, %p63
      %p66 = scmp.ne.s32.totalorder %s49, %s65
      %p67 = scmp.eq.s32.totalorder %s27, 0
      %p68 = por %p66, %p67
      %s69 = ssub.s32 %s28, %s40
      %s70 = ssub.s32 %s29, %s36
      %s71 = sor.u32 %s69, %s70
      %p72 = scmp.eq.s32.totalorder %s71, 0
      %s74 = sadd.s32 %s73, 1
      %s75 = scalar_select %p72, %s73, %s74
      %p78 = pneg %p72
      %p79 = scmp.eq.s32.totalorder %s21, 1
      %p80 = por %p78, %p79
      %p81 = scmp.ne.s32.totalorder %s73, %s76
      %p82 = scmp.eq.s32.totalorder %s21, 0
      %p83 = por %p81, %p82
      %p84 = scmp.ne.s32.totalorder %s73, %s76
      %p85 = scmp.eq.s32.totalorder %s26, 1
      %p86 = por %p84, %p85
      %p87 = scmp.ne.s32.totalorder %s76, %s77
      %p88 = scmp.eq.s32.totalorder %s26, 0
      %p89 = por %p87, %p88
      %p90 = scmp.ne.s32.totalorder %s76, %s77
      %p91 = scmp.eq.s32.totalorder %s27, 1
      %p92 = por %p90, %p91
      %p94 = scmp.ne.s32.totalorder %s77, %s93
      %p95 = scmp.eq.s32.totalorder %s27, 0
      %p96 = por %p94, %p95
      %s98 = sadd.s32 %s97, 1
      %p101 = scmp.eq.s32.totalorder %s21, 1
      %p102 = scmp.ne.s32.totalorder %s97, %s99
      %p103 = scmp.eq.s32.totalorder %s21, 0
      %p104 = por %p102, %p103
      %p105 = scmp.ne.s32.totalorder %s97, %s99
      %p106 = scmp.eq.s32.totalorder %s26, 1
      %p107 = por %p105, %p106
      %p108 = scmp.ne.s32.totalorder %s99, %s100
      %p109 = scmp.eq.s32.totalorder %s26, 0
      %p110 = por %p108, %p109
      %p111 = scmp.ne.s32.totalorder %s99, %s100
      %p112 = scmp.eq.s32.totalorder %s27, 1
      %p113 = por %p111, %p112
      %p115 = scmp.ne.s32.totalorder %s100, %s114
      %p116 = scmp.eq.s32.totalorder %s27, 0
      %p117 = por %p115, %p116
      %s119 = sadd.s32 %s118, 1
      %p122 = scmp.eq.s32.totalorder %s21, 1
      %p123 = scmp.ne.s32.totalorder %s118, %s120
      %p124 = scmp.eq.s32.totalorder %s21, 0
      %p125 = por %p123, %p124
      %p126 = scmp.ne.s32.totalorder %s118, %s120
      %p127 = scmp.eq.s32.totalorder %s26, 1
      %p128 = por %p126, %p127
      %p129 = scmp.ne.s32.totalorder %s120, %s121
      %p130 = scmp.eq.s32.totalorder %s26, 0
      %p131 = por %p129, %p130
      %p132 = scmp.ne.s32.totalorder %s120, %s121
      %p133 = scmp.eq.s32.totalorder %s27, 1
      %p134 = por %p132, %p133
      %p136 = scmp.ne.s32.totalorder %s121, %s135
      %p137 = scmp.eq.s32.totalorder %s27, 0
      %p138 = por %p136, %p137
      %s140 = sadd.s32 %s139, 1
      %p143 = scmp.eq.s32.totalorder %s21, 1
      %p144 = scmp.ne.s32.totalorder %s139, %s141
      %p145 = scmp.eq.s32.totalorder %s21, 0
      %p146 = por %p144, %p145
      %p147 = scmp.ne.s32.totalorder %s139, %s141
      %p148 = scmp.eq.s32.totalorder %s26, 1
      %p149 = por %p147, %p148
      %p150 = scmp.ne.s32.totalorder %s141, %s142
      %p151 = scmp.eq.s32.totalorder %s26, 0
      %p152 = por %p150, %p151
      %p153 = scmp.ne.s32.totalorder %s141, %s142
      %p154 = scmp.eq.s32.totalorder %s27, 1
      %p155 = por %p153, %p154
      %p157 = scmp.ne.s32.totalorder %s142, %s156
      %p158 = scmp.eq.s32.totalorder %s27, 0
      %p159 = por %p157, %p158
      %s160 = ssub.s32 %s28, %s40
      %s161 = ssub.s32 %s29, %s36
      %s162 = sor.u32 %s160, %s161
      %p163 = scmp.eq.s32.totalorder %s162, 0
      %s165 = sadd.s32 %s164, 1
      %s166 = scalar_select %p163, %s164, %s165
      %p169 = pneg %p163
      %p170 = scmp.eq.s32.totalorder %s21, 1
      %p171 = por %p169, %p170
      %p172 = scmp.ne.s32.totalorder %s164, %s167
      %p173 = scmp.eq.s32.totalorder %s21, 0
      %p174 = por %p172, %p173
      %p175 = scmp.ne.s32.totalorder %s164, %s167
      %p176 = scmp.eq.s32.totalorder %s26, 1
      %p177 = por %p175, %p176
      %p178 = scmp.ne.s32.totalorder %s167, %s168
      %p179 = scmp.eq.s32.totalorder %s26, 0
      %p180 = por %p178, %p179
      %p181 = scmp.ne.s32.totalorder %s167, %s168
      %p182 = scmp.eq.s32.totalorder %s27, 1
      %p183 = por %p181, %p182
      %p185 = scmp.ne.s32.totalorder %s168, %s184
      %p186 = scmp.eq.s32.totalorder %s27, 0
      %p187 = por %p185, %p186
      %p188 = scmp.le.s32.totalorder 1, %s21
      %p189 = scmp.lt.s32.totalorder %s21, 3
      %p190 = pnand %p188, %p189
      %p191 = pneg %p190
      // Predicated region
      $region9: #{tpu_custom_call.1} parent=5 // pred_check
        _
      $region10: #{tpu_custom_call.1} parent=5 // pred_check_branch
        %193 = sbr.rel (%p190) target = $region12
      $region11: #{tpu_custom_call.1} parent=5 // pred_region
        %s194 = ssub.s32 %s21, 1
        // Predicated region
        $region13: #{tpu_custom_call.1} parent=11 // pred_check
          %p195 = pneg %p110
        $region14: #{tpu_custom_call.1} parent=11 // pred_check_branch
          %197 = sbr.rel (%p195) target = $region16
        $region15: #{tpu_custom_call.1} parent=11 // pred_region
          %s199 = ssub.s32 3072, 3072
          %200 = vsyncadd [#allocation6], %s199
          %s201 = sshll.u32 [#allocation7], 4
          %s202 = int_to_ptr.vmem [resolvable:$true] %s201
          %207 = dma.hbm_to_vmem [thread:$0]  %s2, 3072, %s202, [#allocation6], 64, 64, 4
        $region16: #{tpu_custom_call.1} parent=11 // pred_fallthru
          _
        // Predicated region
        $region17: #{tpu_custom_call.1} parent=11 // pred_check
          %p208 = pneg %p131
        $region18: #{tpu_custom_call.1} parent=11 // pred_check_branch
          %210 = sbr.rel (%p208) target = $region20
        $region19: #{tpu_custom_call.1} parent=11 // pred_region
          %s212 = ssub.s32 3072, 3072
          %213 = vsyncadd [#allocation9], %s212
          %s214 = sshll.u32 [#allocation8], 4
          %s215 = int_to_ptr.vmem [resolvable:$true] %s214
          %220 = dma.hbm_to_vmem [thread:$0]  %s3, 3072, %s215, [#allocation9], 64, 64, 4
        $region20: #{tpu_custom_call.1} parent=11 // pred_fallthru
          _
        // Predicated region
        $region21: #{tpu_custom_call.1} parent=11 // pred_check
          %p221 = pneg %p152
        $region22: #{tpu_custom_call.1} parent=11 // pred_check_branch
          %223 = sbr.rel (%p221) target = $region24
        $region23: #{tpu_custom_call.1} parent=11 // pred_region
          %s225 = ssub.s32 128, 128
          %226 = vsyncadd [#allocation9], %s225
          %s228 = sshll.u32 [#allocation10], 4
          %s229 = int_to_ptr.vmem [resolvable:$true] %s228
          %231 = dma.hbm_to_vmem [thread:$0]  %s4, 128, %s229, [#allocation9]
        $region24: #{tpu_custom_call.1} parent=11 // pred_fallthru
          _
      $region12: #{tpu_custom_call.1} parent=5 // pred_fallthru
        _
      %p232 = scmp.lt.s32.totalorder %s21, 2
      // Predicated region
      $region25: #{tpu_custom_call.1} parent=5 // pred_check
        %p233 = pneg %p232
      $region26: #{tpu_custom_call.1} parent=5 // pred_check_branch
        %235 = sbr.rel (%p233) target = $region28
      $region27: #{tpu_custom_call.1} parent=5 // pred_region
        // Predicated region
        $region29: #{tpu_custom_call.1} parent=27 // pred_check
          %p236 = pneg %p55
        $region30: #{tpu_custom_call.1} parent=27 // pred_check_branch
          %238 = sbr.rel (%p236) target = $region32
        $region31: #{tpu_custom_call.1} parent=27 // pred_region
          %s239 = sand.u32 %s45, 1
          %s240 = scalar_lea.sflag [#allocation3], %s239
          %s241 = sand.u32 %s45, 1
          %s242 = smul.addr %s241, 16
          %s243 = scalar_lea.vmem [#allocation2], %s242
          %s244 = smul.u32 2, %s29
          %s246 = ssub.s32 256, 256
          %247 = vsyncadd %s240, %s246
          %s248 = smul.addr %s28, 2
          %s249 = sadd.s32 %s244, %s248
          %s250 = smul.addr %s249, 128
          %s251 = scalar_lea.hbm %s0, %s250
          %s252 = sshll.u32 %s243, 4
          %s253 = int_to_ptr.vmem [resolvable:$true] %s252
          %258 = dma.hbm_to_vmem [thread:$0]  %s251, 256, %s253, %s240, 128, 128, 8
        $region32: #{tpu_custom_call.1} parent=27 // pred_fallthru
          _
        // Predicated region
        $region33: #{tpu_custom_call.1} parent=27 // pred_check
          %p259 = pneg %p83
        $region34: #{tpu_custom_call.1} parent=27 // pred_check_branch
          %261 = sbr.rel (%p259) target = $region36
        $region35: #{tpu_custom_call.1} parent=27 // pred_region
          %s262 = sand.u32 %s21, 1
          %s263 = scalar_lea.sflag [#allocation6], %s262
          %s264 = sand.u32 %s73, 1
          %s265 = smul.addr %s264, 8
          %s266 = scalar_lea.vmem [#allocation5], %s265
          %s268 = ssub.s32 128, 128
          %269 = vsyncadd %s263, %s268
          %s270 = sadd.s32 %s29, %s28
          %s271 = smul.addr %s270, 128
          %s272 = scalar_lea.hbm %s1, %s271
          %s274 = sshll.u32 %s266, 4
          %s275 = int_to_ptr.vmem [resolvable:$true] %s274
          %277 = dma.hbm_to_vmem [thread:$0]  %s272, 128, %s275, %s263
        $region36: #{tpu_custom_call.1} parent=27 // pred_fallthru
          _
      $region28: #{tpu_custom_call.1} parent=5 // pred_fallthru
        _
      %p278 = scmp.le.s32.totalorder 1, %s21
      %p279 = scmp.lt.s32.totalorder %s21, 3
      %p280 = pnand %p278, %p279
      %p281 = pneg %p280
      // Predicated region
      $region37: #{tpu_custom_call.1} parent=5 // pred_check
        _
      $region38: #{tpu_custom_call.1} parent=5 // pred_check_branch
        %283 = sbr.rel (%p280) target = $region40
      $region39: #{tpu_custom_call.1} parent=5 // pred_region
        %s284 = ssub.s32 %s21, 1
        %s285 = sand.u32 %s48, 1
        %s286 = scalar_lea.sflag [#allocation3], %s285
        %s287 = sand.u32 %s48, 1
        %s288 = smul.addr %s287, 16
        %s289 = scalar_lea.vmem [#allocation2], %s288
        // Predicated region
        $region41: #{tpu_custom_call.1} parent=39 // pred_check
          %p290 = pneg %p61
        $region42: #{tpu_custom_call.1} parent=39 // pred_check_branch
          %292 = sbr.rel (%p290) target = $region44
        $region43: #{tpu_custom_call.1} parent=39 // pred_region
          %293 = dma.done %s286, 256
        $region44: #{tpu_custom_call.1} parent=39 // pred_fallthru
          _
        %s294 = sand.u32 %s26, 1
        %s295 = scalar_lea.sflag [#allocation6], %s294
        %s296 = sand.u32 %s76, 1
        %s297 = smul.addr %s296, 8
        %s298 = scalar_lea.vmem [#allocation5], %s297
        // Predicated region
        $region45: #{tpu_custom_call.1} parent=39 // pred_check
          %p299 = pneg %p89
        $region46: #{tpu_custom_call.1} parent=39 // pred_check_branch
          %301 = sbr.rel (%p299) target = $region48
        $region47: #{tpu_custom_call.1} parent=39 // pred_region
          %302 = dma.done %s295, 128
        $region48: #{tpu_custom_call.1} parent=39 // pred_fallthru
          _
        // Predicated region
        $region49: #{tpu_custom_call.1} parent=39 // pred_check
          %p303 = pneg %p110
        $region50: #{tpu_custom_call.1} parent=39 // pred_check_branch
          %305 = sbr.rel (%p303) target = $region52
        $region51: #{tpu_custom_call.1} parent=39 // pred_region
          %306 = dma.done [#allocation6], 3072
        $region52: #{tpu_custom_call.1} parent=39 // pred_fallthru
          _
        // Predicated region
        $region53: #{tpu_custom_call.1} parent=39 // pred_check
          %p307 = pneg %p131
        $region54: #{tpu_custom_call.1} parent=39 // pred_check_branch
          %309 = sbr.rel (%p307) target = $region56
        $region55: #{tpu_custom_call.1} parent=39 // pred_region
          %310 = dma.done [#allocation9], 3072
        $region56: #{tpu_custom_call.1} parent=39 // pred_fallthru
          _
        // Predicated region
        $region57: #{tpu_custom_call.1} parent=39 // pred_check
          %p311 = pneg %p152
        $region58: #{tpu_custom_call.1} parent=39 // pred_check_branch
          %313 = sbr.rel (%p311) target = $region60
        $region59: #{tpu_custom_call.1} parent=39 // pred_region
          %314 = dma.done [#allocation9], 128
        $region60: #{tpu_custom_call.1} parent=39 // pred_fallthru
          _
        %s315 = sand.u32 %s48, 1
        %s316 = scalar_lea.sflag [#allocation3], %s315
        %s317 = sand.u32 %s48, 1
        %s318 = smul.addr %s317, 16
        %s319 = scalar_lea.vmem [#allocation2], %s318
        %p320 = pneg %p61
        %p321 = pneg %p58
        %s322 = sand.u32 %s26, 1
        %s323 = scalar_lea.sflag [#allocation6], %s322
        %s324 = sand.u32 %s76, 1
        %s325 = smul.addr %s324, 8
        %s326 = scalar_lea.vmem [#allocation5], %s325
        %p327 = pneg %p89
        %p328 = pneg %p86
        %p329 = pneg %p110
        %p330 = pneg %p107
        %p331 = pneg %p131
        %p332 = pneg %p128
        %p333 = pneg %p152
        %p334 = pneg %p149
        %p335 = pneg %p180
        %p336 = pneg %p177
        %s337 = sand.u32 %s167, 1
        %s338 = scalar_lea.sflag [#allocation4], %s337
        %s339 = sand.u32 %s167, 1
        %s340 = smul.addr %s339, 16
        %s341 = scalar_lea.vmem [#allocation11], %s340
        %s342 = smul.u32 2, %s31
        %s343 = smul.u32 2, %s31
        %v345 = vld [vmem:[%s289] sm:$0xff]
        %v346 = vld [vmem:[%s289 + $0x8] sm:$0xff]
        %v347 = vld [vmem:[%s298] sm:$0xff]
        %v348 = vld [vmem:[#allocation10] sm:$0xff]
        %vm351 = vcmask 1041408
        %v352 = vrot.slane %v345, 6
        %v353 = vrot.slane %v346, 6
        %v354 = vsel %vm351, %v352, %v353
        %v358 = vsel %vm351, %v347, %v352
        %v359 = vsel %vm351, %v353, %v347
        %s360 = smul.u32 %s31, 16
        %s361 = ssub.s32 %s360, 2
        %v362 = vlaneseq
        %v363 = vshrl.u32 %v362, 7
        %v364 = vadd.s32 %v363, 8
        %v365 = vadd.s32 %v363, 16
        %v366 = vstv %s361
        %v367 = vadd.s32 %v363, %v366
        %v368 = vadd.s32 %v364, %v366
        %v369 = vadd.s32 %v365, %v366
        %vm370 = vcmp.ge.s32.totalorder %v367, 0
        %vm371 = vcmp.ge.s32.totalorder %v368, 0
        %vm372 = vcmp.ge.s32.totalorder %v369, 0
        %vm373 = vcmp.lt.s32.totalorder %v367, 16
        %vm374 = vcmp.lt.s32.totalorder %v368, 16
        %vm375 = vcmp.lt.s32.totalorder %v369, 16
        %vm376 = vmand %vm370, %vm373
        %vm377 = vmand %vm371, %vm374
        %vm378 = vmand %vm372, %vm375
        %v379 = vlaneseq
        %v380 = vshrl.u32 %v379, 7
        %v381 = vsub.s32 0, %v380
        %v382 = vrot.slane %v348, %v381
        %v383 = vmul.f32 %v358, %v382
        %v384 = vmul.f32 %v354, %v382
        %v385 = vmul.f32 %v359, %v382
        %v386 = vlaneseq
        %v387 = vshrl.u32 %v386, 7
        %v388 = vsub.s32 1, %v387
        %v389 = vrot.slane %v348, %v388
        %v390 = vadd.f32 %v383, %v389
        %v391 = vadd.f32 %v384, %v389
        %v392 = vadd.f32 %v385, %v389
        %v393 = vsel %vm376, 1, 0
        %v394 = vsel %vm377, 1, 0
        %v395 = vsel %vm378, 1, 0
        %vm396 = vcmp.eq.s32.totalorder %v393, 1
        %vm397 = vcmp.eq.s32.totalorder %v394, 1
        %vm398 = vcmp.eq.s32.totalorder %v395, 1
        %v399 = vsel %vm396, %v390, 0.0
        %v400 = vsel %vm397, %v391, 0.0
        %v401 = vsel %vm398, %v392, 0.0
        %v402 = vpack.c.bf16 %v400, %v399
        %v403 = vpack.c.bf16 %v401, %v401
        %vm404 = vsmask.f32 7424
        %v406 = vshrl.u32 %v402, 16
        %v408 = vshll.u32 %v402, 16
        %v410 = vrot.slane %v408, 1
        %v411 = vor.u32 %v406, %v410
        %v413 = vshll.u32 %v403, 16
        %v415 = vrot.slane %v413, 1
        %v416 = vsel %vm404, %v411, %v415
        %v417 = vshrl.u32 %v403, 16
        %v419 = vor.u32 %v417, %v415
        %vm424 = vcmask 1046528
        %v425 = vrot.slane %v402, 1
        %v426 = vrot.slane %v403, 1
        %v427 = vsel %vm424, %v425, %v426
        %v430 = vld [vmem:[#allocation7] sm:$0xf]
        %v431 = vld [vmem:[#allocation7 + $0x4] sm:$0xf]
        %v432 = vld [vmem:[#allocation7 + $0x8] sm:$0xf]
        %v433 = vld [vmem:[#allocation7 + $0xc] sm:$0xf]
        %v434 = vld [vmem:[#allocation7 + $0x10] sm:$0xf]
        %v435 = vld [vmem:[#allocation7 + $0x14] sm:$0xf]
        %v436 = vld [vmem:[#allocation7 + $0x18] sm:$0xf]
        %v437 = vld [vmem:[#allocation7 + $0x1c] sm:$0xf]
        %v438 = vld [vmem:[#allocation7 + $0x20] sm:$0xf]
        %v439 = vld [vmem:[#allocation7 + $0x24] sm:$0xf]
        %v440 = vld [vmem:[#allocation7 + $0x28] sm:$0xf]
        %v441 = vld [vmem:[#allocation7 + $0x2c] sm:$0xf]
        %v442 = vld [vmem:[#allocation7 + $0x30] sm:$0xf]
        %v443 = vld [vmem:[#allocation7 + $0x34] sm:$0xf]
        %v444 = vld [vmem:[#allocation7 + $0x38] sm:$0xf]
        %v445 = vld [vmem:[#allocation7 + $0x3c] sm:$0xf]
        %v446 = vld [vmem:[#allocation7 + $0x40] sm:$0xf]
        %v447 = vld [vmem:[#allocation7 + $0x44] sm:$0xf]
        %v448 = vld [vmem:[#allocation7 + $0x48] sm:$0xf]
        %v449 = vld [vmem:[#allocation7 + $0x4c] sm:$0xf]
        %v450 = vld [vmem:[#allocation7 + $0x50] sm:$0xf]
        %v451 = vld [vmem:[#allocation7 + $0x54] sm:$0xf]
        %v452 = vld [vmem:[#allocation7 + $0x58] sm:$0xf]
        %v453 = vld [vmem:[#allocation7 + $0x5c] sm:$0xf]
        %v454 = vld [vmem:[#allocation7 + $0x60] sm:$0xf]
        %v455 = vld [vmem:[#allocation7 + $0x64] sm:$0xf]
        %v456 = vld [vmem:[#allocation7 + $0x68] sm:$0xf]
        %v457 = vld [vmem:[#allocation7 + $0x6c] sm:$0xf]
        %v458 = vld [vmem:[#allocation7 + $0x70] sm:$0xf]
        %v459 = vld [vmem:[#allocation7 + $0x74] sm:$0xf]
        %v460 = vld [vmem:[#allocation7 + $0x78] sm:$0xf]
        %v461 = vld [vmem:[#allocation7 + $0x7c] sm:$0xf]
        %v462 = vld [vmem:[#allocation7 + $0x80] sm:$0xf]
        %v463 = vld [vmem:[#allocation7 + $0x84] sm:$0xf]
        %v464 = vld [vmem:[#allocation7 + $0x88] sm:$0xf]
        %v465 = vld [vmem:[#allocation7 + $0x8c] sm:$0xf]
        %v466 = vld [vmem:[#allocation7 + $0x90] sm:$0xf]
        %v467 = vld [vmem:[#allocation7 + $0x94] sm:$0xf]
        %v468 = vld [vmem:[#allocation7 + $0x98] sm:$0xf]
        %v469 = vld [vmem:[#allocation7 + $0x9c] sm:$0xf]
        %v470 = vld [vmem:[#allocation7 + $0xa0] sm:$0xf]
        %v471 = vld [vmem:[#allocation7 + $0xa4] sm:$0xf]
        %v472 = vld [vmem:[#allocation7 + $0xa8] sm:$0xf]
        %v473 = vld [vmem:[#allocation7 + $0xac] sm:$0xf]
        %v474 = vld [vmem:[#allocation7 + $0xb0] sm:$0xf]
        %v475 = vld [vmem:[#allocation7 + $0xb4] sm:$0xf]
        %v476 = vld [vmem:[#allocation7 + $0xb8] sm:$0xf]
        %v477 = vld [vmem:[#allocation7 + $0xbc] sm:$0xf]
        %v526 = vunpack.c.l.b16 %v430
        %v527 = vunpack.c.l.b16 %v431
        %v528 = vunpack.c.l.b16 %v432
        %v529 = vunpack.c.l.b16 %v433
        %v530 = vunpack.c.l.b16 %v434
        %v531 = vunpack.c.l.b16 %v435
        %v532 = vunpack.c.l.b16 %v436
        %v533 = vunpack.c.l.b16 %v437
        %v534 = vunpack.c.l.b16 %v438
        %v535 = vunpack.c.l.b16 %v439
        %v536 = vunpack.c.l.b16 %v440
        %v537 = vunpack.c.l.b16 %v441
        %v538 = vunpack.c.l.b16 %v442
        %v539 = vunpack.c.l.b16 %v443
        %v540 = vunpack.c.l.b16 %v444
        %v541 = vunpack.c.l.b16 %v445
        %v542 = vunpack.c.l.b16 %v446
        %v543 = vunpack.c.l.b16 %v447
        %v544 = vunpack.c.l.b16 %v448
        %v545 = vunpack.c.l.b16 %v449
        %v546 = vunpack.c.l.b16 %v450
        %v547 = vunpack.c.l.b16 %v451
        %v548 = vunpack.c.l.b16 %v452
        %v549 = vunpack.c.l.b16 %v453
        %v550 = vunpack.c.l.b16 %v454
        %v551 = vunpack.c.l.b16 %v455
        %v552 = vunpack.c.l.b16 %v456
        %v553 = vunpack.c.l.b16 %v457
        %v554 = vunpack.c.l.b16 %v458
        %v555 = vunpack.c.l.b16 %v459
        %v556 = vunpack.c.l.b16 %v460
        %v557 = vunpack.c.l.b16 %v461
        %v558 = vunpack.c.l.b16 %v462
        %v559 = vunpack.c.l.b16 %v463
        %v560 = vunpack.c.l.b16 %v464
        %v561 = vunpack.c.l.b16 %v465
        %v562 = vunpack.c.l.b16 %v466
        %v563 = vunpack.c.l.b16 %v467
        %v564 = vunpack.c.l.b16 %v468
        %v565 = vunpack.c.l.b16 %v469
        %v566 = vunpack.c.l.b16 %v470
        %v567 = vunpack.c.l.b16 %v471
        %v568 = vunpack.c.l.b16 %v472
        %v569 = vunpack.c.l.b16 %v473
        %v570 = vunpack.c.l.b16 %v474
        %v571 = vunpack.c.l.b16 %v475
        %v572 = vunpack.c.l.b16 %v476
        %v573 = vunpack.c.l.b16 %v477
        %v574 = vpack.c.b16 %v527, %v526
        %v575 = vpack.c.b16 %v529, %v528
        %v576 = vpack.c.b16 %v531, %v530
        %v577 = vpack.c.b16 %v533, %v532
        %v578 = vpack.c.b16 %v535, %v534
        %v579 = vpack.c.b16 %v537, %v536
        %v580 = vpack.c.b16 %v539, %v538
        %v581 = vpack.c.b16 %v541, %v540
        %v582 = vpack.c.b16 %v543, %v542
        %v583 = vpack.c.b16 %v545, %v544
        %v584 = vpack.c.b16 %v547, %v546
        %v585 = vpack.c.b16 %v549, %v548
        %v586 = vpack.c.b16 %v551, %v550
        %v587 = vpack.c.b16 %v553, %v552
        %v588 = vpack.c.b16 %v555, %v554
        %v589 = vpack.c.b16 %v557, %v556
        %v590 = vpack.c.b16 %v559, %v558
        %v591 = vpack.c.b16 %v561, %v560
        %v592 = vpack.c.b16 %v563, %v562
        %v593 = vpack.c.b16 %v565, %v564
        %v594 = vpack.c.b16 %v567, %v566
        %v595 = vpack.c.b16 %v569, %v568
        %v596 = vpack.c.b16 %v571, %v570
        %v597 = vpack.c.b16 %v573, %v572
        %622 = vmatprep.subr.bf16.mxu0 0
        %623 = vmatpush1.bf16.msra.mxu0 %v581
        %624 = vmatprep.subr.bf16.mxu0 0
        %625 = vmatpush1.bf16.msra.mxu0 %v580
        %626 = vmatprep.subr.bf16.mxu0 0
        %627 = vmatpush1.bf16.msra.mxu0 %v579
        %628 = vmatprep.subr.bf16.mxu0 0
        %629 = vmatpush1.bf16.msra.mxu0 %v578
        %630 = vmatprep.subr.bf16.mxu0 0
        %631 = vmatpush1.bf16.msra.mxu0 %v577
        %632 = vmatprep.subr.bf16.mxu0 0
        %633 = vmatpush1.bf16.msra.mxu0 %v576
        %634 = vmatprep.subr.bf16.mxu0 0
        %635 = vmatpush1.bf16.msra.mxu0 %v575
        %636 = vmatprep.subr.bf16.mxu0 0
        %637 = vmatpush1.bf16.msra.mxu0 %v574
        %638 = vmatprep.subr.bf16.mxu0 0
        %639 = vmatpush2.bf16.msra.mxu0 %v589
        %640 = vmatprep.subr.bf16.mxu0 0
        %641 = vmatpush2.bf16.msra.mxu0 %v588
        %642 = vmatprep.subr.bf16.mxu0 0
        %643 = vmatpush2.bf16.msra.mxu0 %v587
        %644 = vmatprep.subr.bf16.mxu0 0
        %645 = vmatpush2.bf16.msra.mxu0 %v586
        %646 = vmatprep.subr.bf16.mxu0 0
        %647 = vmatpush2.bf16.msra.mxu0 %v585
        %648 = vmatprep.subr.bf16.mxu0 0
        %649 = vmatpush2.bf16.msra.mxu0 %v584
        %650 = vmatprep.subr.bf16.mxu0 0
        %651 = vmatpush2.bf16.msra.mxu0 %v583
        %652 = vmatprep.subr.bf16.mxu0 0
        %653 = vmatpush2.bf16.msra.mxu0 %v582
        %654 = vmatprep.mubr.bf16.mxu0 %v416
        %655 = vmatmul.mubr.bf16.gmra.mxu0 %v402
        %v656 = vpop.f32.mrf.mxu0
        %v657 = vadd.f32 0.0, %v656
        %v658 = vpop.f32.mrf.mxu0
        %v659 = vpop.f32.mrf.mxu0
        %v660 = vadd.f32 0.0, %v659
        %v661 = vpop.f32.mrf.mxu0
        %662 = vmatprep.mubr.bf16.mxu0 %v419
        %663 = vmatmul.mubr.bf16.gmra.mxu0 %v403
        %v664 = vpop.f32.mrf.mxu0
        %v665 = vadd.f32 0.0, %v664
        %v666 = vpop.f32.mrf.mxu0
        %v667 = vpop.f32.mrf.mxu0
        %v668 = vpop.f32.mrf.mxu0
        %669 = vdwg.mxu0
        %670 = vmatprep.subr.bf16.mxu0 0
        %671 = vmatpush1.bf16.msra.mxu0 %v597
        %672 = vmatprep.subr.bf16.mxu0 0
        %673 = vmatpush1.bf16.msra.mxu0 %v596
        %674 = vmatprep.subr.bf16.mxu0 0
        %675 = vmatpush1.bf16.msra.mxu0 %v595
        %676 = vmatprep.subr.bf16.mxu0 0
        %677 = vmatpush1.bf16.msra.mxu0 %v594
        %678 = vmatprep.subr.bf16.mxu0 0
        %679 = vmatpush1.bf16.msra.mxu0 %v593
        %680 = vmatprep.subr.bf16.mxu0 0
        %681 = vmatpush1.bf16.msra.mxu0 %v592
        %682 = vmatprep.subr.bf16.mxu0 0
        %683 = vmatpush1.bf16.msra.mxu0 %v591
        %684 = vmatprep.subr.bf16.mxu0 0
        %685 = vmatpush1.bf16.msra.mxu0 %v590
        %686 = vmatprep.subr.bf16.mxu0 0
        %687 = vmatpush2.bf16.msra.mxu0 0
        %688 = vmatprep.subr.bf16.mxu0 0
        %689 = vmatpush2.bf16.msra.mxu0 0
        %690 = vmatprep.subr.bf16.mxu0 0
        %691 = vmatpush2.bf16.msra.mxu0 0
        %692 = vmatprep.subr.bf16.mxu0 0
        %693 = vmatpush2.bf16.msra.mxu0 0
        %694 = vmatprep.subr.bf16.mxu0 0
        %695 = vmatpush2.bf16.msra.mxu0 0
        %696 = vmatprep.subr.bf16.mxu0 0
        %697 = vmatpush2.bf16.msra.mxu0 0
        %698 = vmatprep.subr.bf16.mxu0 0
        %699 = vmatpush2.bf16.msra.mxu0 0
        %700 = vmatprep.subr.bf16.mxu0 0
        %701 = vmatpush2.bf16.msra.mxu0 0
        %702 = vmatprep.mubr.bf16.mxu0 0
        %703 = vmatmul.mubr.bf16.gmra.mxu0 %v427
        %v704 = vpop.f32.mrf.mxu0
        %v705 = vadd.f32 %v657, %v704
        %v706 = vpop.f32.mrf.mxu0
        %v707 = vpop.f32.mrf.mxu0
        %v708 = vadd.f32 %v660, %v707
        %v709 = vpop.f32.mrf.mxu0
        %710 = vmatprep.mubr.bf16.mxu0 0
        %711 = vmatmul.mubr.bf16.gmra.mxu0 %v426
        %v712 = vpop.f32.mrf.mxu0
        %v713 = vadd.f32 %v665, %v712
        %v714 = vpop.f32.mrf.mxu0
        %v715 = vpop.f32.mrf.mxu0
        %v716 = vpop.f32.mrf.mxu0
        %717 = vdwg.mxu0
        %v718 = vlaneseq
        %v719 = vshrl.u32 %v718, 7
        %v720 = vsub.s32 2, %v719
        %v721 = vrot.slane %v348, %v720
        %v722 = vmul.f32 %v705, %v721
        %v723 = vmul.f32 %v708, %v721
        %v724 = vmul.f32 %v713, %v721
        %v725 = vlaneseq
        %v726 = vshrl.u32 %v725, 7
        %v727 = vsub.s32 3, %v726
        %v728 = vrot.slane %v348, %v727
        %v729 = vadd.f32 %v722, %v728
        %v730 = vadd.f32 %v723, %v728
        %v731 = vadd.f32 %v724, %v728
        %v732 = vmax.f32 %v729, 0.0
        %v733 = vmax.f32 %v730, 0.0
        %v734 = vmax.f32 %v731, 0.0
        %vm738 = vcmask 1040384
        %v739 = vrot.slane %v732, 7
        %v740 = vrot.slane %v733, 7
        %v741 = vsel %vm738, %v739, %v740
        %v742 = vrot.slane %v734, 7
        %v743 = vsel %vm738, %v740, %v742
        %v747 = vsel %vm396, %v739, 0.0
        %v748 = vsel %vm397, %v741, 0.0
        %v749 = vsel %vm398, %v743, 0.0
        %v750 = vpack.c.bf16 %v748, %v747
        %v751 = vpack.c.bf16 %v749, %v749
        %v753 = vshrl.u32 %v750, 16
        %v755 = vshll.u32 %v750, 16
        %v757 = vrot.slane %v755, 1
        %v758 = vor.u32 %v753, %v757
        %v760 = vshll.u32 %v751, 16
        %v762 = vrot.slane %v760, 1
        %v763 = vsel %vm404, %v758, %v762
        %v764 = vshrl.u32 %v751, 16
        %v768 = vrot.slane %v750, 1
        %v769 = vrot.slane %v751, 1
        %v770 = vsel %vm424, %v768, %v769
        %v771 = vld [vmem:[#allocation8] sm:$0xf]
        %v772 = vld [vmem:[#allocation8 + $0x4] sm:$0xf]
        %v773 = vld [vmem:[#allocation8 + $0x8] sm:$0xf]
        %v774 = vld [vmem:[#allocation8 + $0xc] sm:$0xf]
        %v775 = vld [vmem:[#allocation8 + $0x10] sm:$0xf]
        %v776 = vld [vmem:[#allocation8 + $0x14] sm:$0xf]
        %v777 = vld [vmem:[#allocation8 + $0x18] sm:$0xf]
        %v778 = vld [vmem:[#allocation8 + $0x1c] sm:$0xf]
        %v779 = vld [vmem:[#allocation8 + $0x20] sm:$0xf]
        %v780 = vld [vmem:[#allocation8 + $0x24] sm:$0xf]
        %v781 = vld [vmem:[#allocation8 + $0x28] sm:$0xf]
        %v782 = vld [vmem:[#allocation8 + $0x2c] sm:$0xf]
        %v783 = vld [vmem:[#allocation8 + $0x30] sm:$0xf]
        %v784 = vld [vmem:[#allocation8 + $0x34] sm:$0xf]
        %v785 = vld [vmem:[#allocation8 + $0x38] sm:$0xf]
        %v786 = vld [vmem:[#allocation8 + $0x3c] sm:$0xf]
        %v787 = vld [vmem:[#allocation8 + $0x40] sm:$0xf]
        %v788 = vld [vmem:[#allocation8 + $0x44] sm:$0xf]
        %v789 = vld [vmem:[#allocation8 + $0x48] sm:$0xf]
        %v790 = vld [vmem:[#allocation8 + $0x4c] sm:$0xf]
        %v791 = vld [vmem:[#allocation8 + $0x50] sm:$0xf]
        %v792 = vld [vmem:[#allocation8 + $0x54] sm:$0xf]
        %v793 = vld [vmem:[#allocation8 + $0x58] sm:$0xf]
        %v794 = vld [vmem:[#allocation8 + $0x5c] sm:$0xf]
        %v795 = vld [vmem:[#allocation8 + $0x60] sm:$0xf]
        %v796 = vld [vmem:[#allocation8 + $0x64] sm:$0xf]
        %v797 = vld [vmem:[#allocation8 + $0x68] sm:$0xf]
        %v798 = vld [vmem:[#allocation8 + $0x6c] sm:$0xf]
        %v799 = vld [vmem:[#allocation8 + $0x70] sm:$0xf]
        %v800 = vld [vmem:[#allocation8 + $0x74] sm:$0xf]
        %v801 = vld [vmem:[#allocation8 + $0x78] sm:$0xf]
        %v802 = vld [vmem:[#allocation8 + $0x7c] sm:$0xf]
        %v803 = vld [vmem:[#allocation8 + $0x80] sm:$0xf]
        %v804 = vld [vmem:[#allocation8 + $0x84] sm:$0xf]
        %v805 = vld [vmem:[#allocation8 + $0x88] sm:$0xf]
        %v806 = vld [vmem:[#allocation8 + $0x8c] sm:$0xf]
        %v807 = vld [vmem:[#allocation8 + $0x90] sm:$0xf]
        %v808 = vld [vmem:[#allocation8 + $0x94] sm:$0xf]
        %v809 = vld [vmem:[#allocation8 + $0x98] sm:$0xf]
        %v810 = vld [vmem:[#allocation8 + $0x9c] sm:$0xf]
        %v811 = vld [vmem:[#allocation8 + $0xa0] sm:$0xf]
        %v812 = vld [vmem:[#allocation8 + $0xa4] sm:$0xf]
        %v813 = vld [vmem:[#allocation8 + $0xa8] sm:$0xf]
        %v814 = vld [vmem:[#allocation8 + $0xac] sm:$0xf]
        %v815 = vld [vmem:[#allocation8 + $0xb0] sm:$0xf]
        %v816 = vld [vmem:[#allocation8 + $0xb4] sm:$0xf]
        %v817 = vld [vmem:[#allocation8 + $0xb8] sm:$0xf]
        %v818 = vld [vmem:[#allocation8 + $0xbc] sm:$0xf]
        %v820 = vshrl.u32 %v763, 16
        %v822 = vshll.u32 %v763, 16
        %v824 = vrot.slane %v822, 1
        %v825 = vor.u32 %v820, %v824
        %v827 = vshll.u32 %v764, 16
        %v829 = vrot.slane %v827, 1
        %v830 = vsel %vm404, %v825, %v829
        %v832 = vshrl.u32 %v770, 16
        %v834 = vshll.u32 %v770, 16
        %v836 = vrot.slane %v834, 1
        %v837 = vor.u32 %v832, %v836
        %v839 = vshll.u32 %v769, 16
        %v841 = vrot.slane %v839, 1
        %v842 = vsel %vm404, %v837, %v841
        %v894 = vunpack.c.l.b16 %v771
        %v895 = vunpack.c.l.b16 %v772
        %v896 = vunpack.c.l.b16 %v773
        %v897 = vunpack.c.l.b16 %v774
        %v898 = vunpack.c.l.b16 %v775
        %v899 = vunpack.c.l.b16 %v776
        %v900 = vunpack.c.l.b16 %v777
        %v901 = vunpack.c.l.b16 %v778
        %v902 = vunpack.c.l.b16 %v779
        %v903 = vunpack.c.l.b16 %v780
        %v904 = vunpack.c.l.b16 %v781
        %v905 = vunpack.c.l.b16 %v782
        %v906 = vunpack.c.l.b16 %v783
        %v907 = vunpack.c.l.b16 %v784
        %v908 = vunpack.c.l.b16 %v785
        %v909 = vunpack.c.l.b16 %v786
        %v910 = vunpack.c.l.b16 %v787
        %v911 = vunpack.c.l.b16 %v788
        %v912 = vunpack.c.l.b16 %v789
        %v913 = vunpack.c.l.b16 %v790
        %v914 = vunpack.c.l.b16 %v791
        %v915 = vunpack.c.l.b16 %v792
        %v916 = vunpack.c.l.b16 %v793
        %v917 = vunpack.c.l.b16 %v794
        %v918 = vunpack.c.l.b16 %v795
        %v919 = vunpack.c.l.b16 %v796
        %v920 = vunpack.c.l.b16 %v797
        %v921 = vunpack.c.l.b16 %v798
        %v922 = vunpack.c.l.b16 %v799
        %v923 = vunpack.c.l.b16 %v800
        %v924 = vunpack.c.l.b16 %v801
        %v925 = vunpack.c.l.b16 %v802
        %v926 = vunpack.c.l.b16 %v803
        %v927 = vunpack.c.l.b16 %v804
        %v928 = vunpack.c.l.b16 %v805
        %v929 = vunpack.c.l.b16 %v806
        %v930 = vunpack.c.l.b16 %v807
        %v931 = vunpack.c.l.b16 %v808
        %v932 = vunpack.c.l.b16 %v809
        %v933 = vunpack.c.l.b16 %v810
        %v934 = vunpack.c.l.b16 %v811
        %v935 = vunpack.c.l.b16 %v812
        %v936 = vunpack.c.l.b16 %v813
        %v937 = vunpack.c.l.b16 %v814
        %v938 = vunpack.c.l.b16 %v815
        %v939 = vunpack.c.l.b16 %v816
        %v940 = vunpack.c.l.b16 %v817
        %v941 = vunpack.c.l.b16 %v818
        %v942 = vpack.c.b16 %v895, %v894
        %v943 = vpack.c.b16 %v897, %v896
        %v944 = vpack.c.b16 %v899, %v898
        %v945 = vpack.c.b16 %v901, %v900
        %v946 = vpack.c.b16 %v903, %v902
        %v947 = vpack.c.b16 %v905, %v904
        %v948 = vpack.c.b16 %v907, %v906
        %v949 = vpack.c.b16 %v909, %v908
        %v950 = vpack.c.b16 %v911, %v910
        %v951 = vpack.c.b16 %v913, %v912
        %v952 = vpack.c.b16 %v915, %v914
        %v953 = vpack.c.b16 %v917, %v916
        %v954 = vpack.c.b16 %v919, %v918
        %v955 = vpack.c.b16 %v921, %v920
        %v956 = vpack.c.b16 %v923, %v922
        %v957 = vpack.c.b16 %v925, %v924
        %v958 = vpack.c.b16 %v927, %v926
        %v959 = vpack.c.b16 %v929, %v928
        %v960 = vpack.c.b16 %v931, %v930
        %v961 = vpack.c.b16 %v933, %v932
        %v962 = vpack.c.b16 %v935, %v934
        %v963 = vpack.c.b16 %v937, %v936
        %v964 = vpack.c.b16 %v939, %v938
        %v965 = vpack.c.b16 %v941, %v940
        %990 = vmatprep.subr.bf16.mxu0 0
        %991 = vmatpush1.bf16.msra.mxu0 %v949
        %992 = vmatprep.subr.bf16.mxu0 0
        %993 = vmatpush1.bf16.msra.mxu0 %v948
        %994 = vmatprep.subr.bf16.mxu0 0
        %995 = vmatpush1.bf16.msra.mxu0 %v947
        %996 = vmatprep.subr.bf16.mxu0 0
        %997 = vmatpush1.bf16.msra.mxu0 %v946
        %998 = vmatprep.subr.bf16.mxu0 0
        %999 = vmatpush1.bf16.msra.mxu0 %v945
        %1000 = vmatprep.subr.bf16.mxu0 0
        %1001 = vmatpush1.bf16.msra.mxu0 %v944
        %1002 = vmatprep.subr.bf16.mxu0 0
        %1003 = vmatpush1.bf16.msra.mxu0 %v943
        %1004 = vmatprep.subr.bf16.mxu0 0
        %1005 = vmatpush1.bf16.msra.mxu0 %v942
        %1006 = vmatprep.subr.bf16.mxu0 0
        %1007 = vmatpush2.bf16.msra.mxu0 %v957
        %1008 = vmatprep.subr.bf16.mxu0 0
        %1009 = vmatpush2.bf16.msra.mxu0 %v956
        %1010 = vmatprep.subr.bf16.mxu0 0
        %1011 = vmatpush2.bf16.msra.mxu0 %v955
        %1012 = vmatprep.subr.bf16.mxu0 0
        %1013 = vmatpush2.bf16.msra.mxu0 %v954
        %1014 = vmatprep.subr.bf16.mxu0 0
        %1015 = vmatpush2.bf16.msra.mxu0 %v953
        %1016 = vmatprep.subr.bf16.mxu0 0
        %1017 = vmatpush2.bf16.msra.mxu0 %v952
        %1018 = vmatprep.subr.bf16.mxu0 0
        %1019 = vmatpush2.bf16.msra.mxu0 %v951
        %1020 = vmatprep.subr.bf16.mxu0 0
        %1021 = vmatpush2.bf16.msra.mxu0 %v950
        %1022 = vmatprep.mubr.bf16.mxu0 %v830
        %1023 = vmatmul.mubr.bf16.gmra.mxu0 %v763
        %v1024 = vpop.f32.mrf.mxu0
        %v1025 = vadd.f32 0.0, %v1024
        %v1026 = vpop.f32.mrf.mxu0
        %v1027 = vpop.f32.mrf.mxu0
        %v1028 = vadd.f32 0.0, %v1027
        %v1029 = vpop.f32.mrf.mxu0
        %1030 = vdwg.mxu0
        %1031 = vmatprep.subr.bf16.mxu0 0
        %1032 = vmatpush1.bf16.msra.mxu0 %v965
        %1033 = vmatprep.subr.bf16.mxu0 0
        %1034 = vmatpush1.bf16.msra.mxu0 %v964
        %1035 = vmatprep.subr.bf16.mxu0 0
        %1036 = vmatpush1.bf16.msra.mxu0 %v963
        %1037 = vmatprep.subr.bf16.mxu0 0
        %1038 = vmatpush1.bf16.msra.mxu0 %v962
        %1039 = vmatprep.subr.bf16.mxu0 0
        %1040 = vmatpush1.bf16.msra.mxu0 %v961
        %1041 = vmatprep.subr.bf16.mxu0 0
        %1042 = vmatpush1.bf16.msra.mxu0 %v960
        %1043 = vmatprep.subr.bf16.mxu0 0
        %1044 = vmatpush1.bf16.msra.mxu0 %v959
        %1045 = vmatprep.subr.bf16.mxu0 0
        %1046 = vmatpush1.bf16.msra.mxu0 %v958
        %1047 = vmatprep.subr.bf16.mxu0 0
        %1048 = vmatpush2.bf16.msra.mxu0 0
        %1049 = vmatprep.subr.bf16.mxu0 0
        %1050 = vmatpush2.bf16.msra.mxu0 0
        %1051 = vmatprep.subr.bf16.mxu0 0
        %1052 = vmatpush2.bf16.msra.mxu0 0
        %1053 = vmatprep.subr.bf16.mxu0 0
        %1054 = vmatpush2.bf16.msra.mxu0 0
        %1055 = vmatprep.subr.bf16.mxu0 0
        %1056 = vmatpush2.bf16.msra.mxu0 0
        %1057 = vmatprep.subr.bf16.mxu0 0
        %1058 = vmatpush2.bf16.msra.mxu0 0
        %1059 = vmatprep.subr.bf16.mxu0 0
        %1060 = vmatpush2.bf16.msra.mxu0 0
        %1061 = vmatprep.subr.bf16.mxu0 0
        %1062 = vmatpush2.bf16.msra.mxu0 0
        %1063 = vmatprep.mubr.bf16.mxu0 0
        %1064 = vmatmul.mubr.bf16.gmra.mxu0 %v842
        %v1065 = vpop.f32.mrf.mxu0
        %v1066 = vadd.f32 %v1025, %v1065
        %v1067 = vpop.f32.mrf.mxu0
        %v1068 = vpop.f32.mrf.mxu0
        %v1069 = vadd.f32 %v1028, %v1068
        %v1070 = vpop.f32.mrf.mxu0
        %1071 = vdwg.mxu0
        %v1072 = vlaneseq
        %v1073 = vshrl.u32 %v1072, 7
        %v1074 = vsub.s32 4, %v1073
        %v1075 = vrot.slane %v348, %v1074
        %v1076 = vmul.f32 %v1066, %v1075
        %v1077 = vmul.f32 %v1069, %v1075
        %v1078 = vlaneseq
        %v1079 = vshrl.u32 %v1078, 7
        %v1080 = vsub.s32 5, %v1079
        %v1081 = vrot.slane %v348, %v1080
        %v1082 = vadd.f32 %v1076, %v1081
        %v1083 = vadd.f32 %v1077, %v1081
        %v1084 = vadd.f32 %v1082, %v345
        %v1085 = vadd.f32 %v1083, %v346
        %1086 = vst [vmem:[%s341] sm:$0xff] %v1084
        %1087 = vst [vmem:[%s341 + $0x8] sm:$0xff] %v1085
        %s1088 = sand.u32 %s167, 1
        %s1089 = scalar_lea.sflag [#allocation4], %s1088
        %s1090 = sand.u32 %s167, 1
        %s1091 = smul.addr %s1090, 16
        %s1092 = scalar_lea.vmem [#allocation11], %s1091
        // Predicated region
        $region61: #{tpu_custom_call.1} parent=39 // pred_check
          %p1093 = pneg %p177
        $region62: #{tpu_custom_call.1} parent=39 // pred_check_branch
          %1095 = sbr.rel (%p1093) target = $region64
        $region63: #{tpu_custom_call.1} parent=39 // pred_region
          %s1096 = smul.u32 2, %s31
          %s1098 = ssub.s32 256, 256
          %1099 = vsyncadd %s1089, %s1098
          %s1100 = smul.addr %s30, 2
          %s1101 = sadd.s32 %s1096, %s1100
          %s1102 = smul.addr %s1101, 128
          %s1103 = scalar_lea.hbm %s5, %s1102
          %s1104 = sshll.u32 %s1092, 4
          %s1105 = int_to_ptr.vmem [resolvable:$true] %s1104
          %1110 = dma.vmem_to_hbm [thread:$0]  %s1105, 256, %s1103, %s1089, 128, 128, 8
        $region64: #{tpu_custom_call.1} parent=39 // pred_fallthru
          _
      $region40: #{tpu_custom_call.1} parent=5 // pred_fallthru
        _
      %p1111 = scmp.le.s32.totalorder 2, %s21
      // Predicated region
      $region65: #{tpu_custom_call.1} parent=5 // pred_check
        %p1112 = pneg %p1111
      $region66: #{tpu_custom_call.1} parent=5 // pred_check_branch
        %1114 = sbr.rel (%p1112) target = $region68
      $region67: #{tpu_custom_call.1} parent=5 // pred_region
        %s1115 = ssub.s32 %s21, 2
        // Predicated region
        $region69: #{tpu_custom_call.1} parent=67 // pred_check
          %p1116 = pneg %p183
        $region70: #{tpu_custom_call.1} parent=67 // pred_check_branch
          %1118 = sbr.rel (%p1116) target = $region72
        $region71: #{tpu_custom_call.1} parent=67 // pred_region
          %s1119 = sand.u32 %s168, 1
          %s1120 = scalar_lea.sflag [#allocation4], %s1119
          %s1121 = sand.u32 %s168, 1
          %s1122 = smul.addr %s1121, 16
          %s1123 = scalar_lea.vmem [#allocation11], %s1122
          %1124 = dma.done %s1120, 256
        $region72: #{tpu_custom_call.1} parent=67 // pred_fallthru
          _
      $region68: #{tpu_custom_call.1} parent=5 // pred_fallthru
        _
    $region6: #{tpu_custom_call.1} parent=1 // loop_footer
      %s25 = sadd.s32 1, %s21
    $region7: #{tpu_custom_call.1} parent=1 // loop_footer_branch
      %20 = sbr.rel target = $region3
    $region8: #{tpu_custom_call.1} parent=1 // loop_exit
      _
    %1125 = vsyncpa [#allocation3], 1
    %s1126 = scalar_lea.sflag [#allocation3], 1
    %1127 = vsyncpa %s1126, 1
    %1128 = vsyncpa [#allocation6], 1
    %s1129 = scalar_lea.sflag [#allocation6], 1
    %1130 = vsyncpa %s1129, 1
    %1131 = vsyncpa [#allocation9], 1
    %1132 = vsyncpa [#allocation4], 1
    %s1133 = scalar_lea.sflag [#allocation4], 1
    %1134 = vsyncpa %s1133, 1

</llo_original>
